<compile_context>
chip_gen: v7x
topology: tpu7x:2x2x1
jax: 0.10.0
libtpu: 0.0.40
codegen_flags: <defaults>
</compile_context>

<pallas_src>
import math

import jax
import jax.numpy as jnp
from jax.experimental import pallas as pl
from jax.experimental.pallas import tpu as pltpu

D_MODEL = 64
N_HEAD = 2
HEAD_DIM = D_MODEL // N_HEAD
FFN_DIM = 4 * D_MODEL
MAX_T = 64            # fixed KV-cache capacity (multiple of 8 sublanes)
V_PAD = 128           # padded logits lanes / padded embedding rows


def _mha_ffn_logits(qi, ki, vi, bias, wof1_ref, bof1_ref, w2lm_ref, b2lm_ref):
    """Shared MHA + FFN + lm_head tail.  qi/ki/vi/bias are f32; weights bf16."""
    scale = jnp.float32(1.0 / math.sqrt(HEAD_DIM))
    head_outs = []
    # TODO(synk): head-packed single-MXU QK^T/PV (block-diag K^T) not applied;
    # it needs a transposed cache layout that conflicts with cheap row appends.
    for h in range(N_HEAD):                       # static unroll, 2 heads
        sl = slice(h * HEAD_DIM, (h + 1) * HEAD_DIM)
        qh = qi[:, sl].astype(jnp.bfloat16)
        kh = ki[:, sl].astype(jnp.bfloat16)
        vh = vi[:, sl].astype(jnp.bfloat16)
        s = jax.lax.dot_general(qh, kh, (((1,), (1,)), ((), ())),
                                preferred_element_type=jnp.float32)
        s = s * scale + bias
        s = s - jnp.max(s, axis=-1, keepdims=True)
        p = jnp.exp(s)
        inv = pl.reciprocal(jnp.sum(p, axis=-1, keepdims=True), approx=True)
        head_outs.append(jnp.dot((p * inv).astype(jnp.bfloat16), vh,
                                 preferred_element_type=jnp.float32))
    attn = jnp.concatenate(head_outs, axis=-1)    # (S, 64) f32

    h1 = jnp.dot(attn.astype(jnp.bfloat16), wof1_ref[...],
                 preferred_element_type=jnp.float32) + bof1_ref[...]
    h1 = jnp.maximum(h1, 0.0)
    return (jnp.dot(h1.astype(jnp.bfloat16), w2lm_ref[...],
                    preferred_element_type=jnp.float32) + b2lm_ref[...])


def _prefill_kernel(x_ref, wa_ref, ba_ref, wof1_ref, bof1_ref, w2lm_ref,
                    b2lm_ref, logits_ref, k_ref, v_ref):
    """Prompt prefill: causal attention, writes the projected K/V cache."""
    S = x_ref.shape[0]
    a = jnp.dot(x_ref[...], wa_ref[...],
                preferred_element_type=jnp.float32) + ba_ref[...]
    ki_new = a[:, :D_MODEL]                       # projected K rows
    vi_new = a[:, D_MODEL:2 * D_MODEL]            # projected V rows
    qi = a[:, 2 * D_MODEL:]                       # projected q (lane 128+)

    k_ref[...] = jnp.zeros_like(k_ref)
    v_ref[...] = jnp.zeros_like(v_ref)
    k_ref[:S, :] = ki_new
    v_ref[:S, :] = vi_new

    rows = jax.lax.broadcasted_iota(jnp.int32, (S, S), 0)
    cols = jax.lax.broadcasted_iota(jnp.int32, (S, S), 1)
    bias = jnp.where(cols > rows, jnp.float32(-1e30), jnp.float32(0.0))
    logits_ref[...] = _mha_ffn_logits(qi, ki_new, vi_new, bias,
                                      wof1_ref, bof1_ref, w2lm_ref, b2lm_ref)


def _decode_kernel(pos0_ref, x0_ref, k_in_ref, v_in_ref, embed_ref,
                   wa_ref, ba_ref, wof1_ref, bof1_ref, w2lm_ref, b2lm_ref,
                   logits_ref, k_ref, v_ref, x_carry):
    """One grid step == one greedy decode token.  State carried across steps."""
    step = pl.program_id(0)

    @pl.when(step == 0)
    def _():
        k_ref[...] = k_in_ref[...]                # one-time cache copy
        v_ref[...] = v_in_ref[...]
        x_carry[...] = x0_ref[...]                # first decode-token embedding

    pos = pos0_ref[0] + step
    x = x_carry[...]                              # (1, 64) bf16
    a = jnp.dot(x, wa_ref[...],
                preferred_element_type=jnp.float32) + ba_ref[...]
    ki_new = a[:, :D_MODEL]
    vi_new = a[:, D_MODEL:2 * D_MODEL]
    qi = a[:, 2 * D_MODEL:]

    # Append only the new row (no full-cache rewrite).
    k_ref[pl.ds(pos, 1), :] = ki_new
    v_ref[pl.ds(pos, 1), :] = vi_new
    ki = k_ref[...]                               # (MAX_T, 64) f32
    vi = v_ref[...]

    cols = jax.lax.broadcasted_iota(jnp.int32, (1, MAX_T), 1)
    bias = jnp.where(cols > pos, jnp.float32(-1e30), jnp.float32(0.0))
    logits = _mha_ffn_logits(qi, ki, vi, bias,
                             wof1_ref, bof1_ref, w2lm_ref, b2lm_ref)
    logits_ref[pl.ds(step, 1), :] = logits        # lane-dense (1, 128) store

    # Greedy next token -> next-step input embedding (no vector->scalar moves):
    # first-occurrence argmax as a one-hot, then one-hot @ embed_table.
    lane = jax.lax.broadcasted_iota(jnp.int32, (1, V_PAD), 1).astype(jnp.float32)
    m = jnp.max(logits, axis=-1, keepdims=True)
    idx = jnp.min(jnp.where(logits >= m, lane, jnp.float32(V_PAD)),
                  axis=-1, keepdims=True)
    onehot = jnp.where(lane == idx, jnp.float32(1.0),
                       jnp.float32(0.0)).astype(jnp.bfloat16)
    x_next = jnp.dot(onehot, embed_ref[...], preferred_element_type=jnp.float32)
    x_carry[...] = x_next.astype(jnp.bfloat16)


def make_prefill(seq_len):
    vmem = pl.BlockSpec(memory_space=pltpu.MemorySpace.VMEM)
    call = pl.pallas_call(
        _prefill_kernel,
        out_shape=(jax.ShapeDtypeStruct((seq_len, V_PAD), jnp.float32),
                   jax.ShapeDtypeStruct((MAX_T, D_MODEL), jnp.float32),
                   jax.ShapeDtypeStruct((MAX_T, D_MODEL), jnp.float32)),
        in_specs=[vmem] * 7,
        out_specs=(vmem, vmem, vmem),
    )

    @jax.jit
    def prefill(x_emb_bf16, fused):
        return call(x_emb_bf16, fused['wa'], fused['ba'], fused['wof1'],
                    fused['bof1'], fused['w2lm'], fused['b2lm'])

    return prefill


def make_decode(n_steps):
    """N fused greedy decode steps in a single pallas_call (grid over steps)."""
    def full2d(shape):
        return pl.BlockSpec(shape, lambda i, p: (0, 0))   # resident whole array

    grid_spec = pltpu.PrefetchScalarGridSpec(
        num_scalar_prefetch=1,                 # pos0 (start position) in SMEM
        grid=(n_steps,),
        in_specs=[
            full2d((1, D_MODEL)),              # x0  (first decode embedding)
            full2d((MAX_T, D_MODEL)),          # k cache in
            full2d((MAX_T, D_MODEL)),          # v cache in
            full2d((V_PAD, D_MODEL)),          # padded embedding table
            full2d((D_MODEL, 3 * D_MODEL)),    # wa   [ki|vi|qi]
            full2d((1, 3 * D_MODEL)),          # ba
            full2d((D_MODEL, FFN_DIM)),        # wof1 (out_proj @ ffn1)
            full2d((1, FFN_DIM)),              # bof1
            full2d((FFN_DIM, V_PAD)),          # w2lm (ffn2 @ lm_head, padded)
            full2d((1, V_PAD)),                # b2lm
        ],
        out_specs=[
            full2d((n_steps, V_PAD)),          # per-step logits
            full2d((MAX_T, D_MODEL)),          # k cache out
            full2d((MAX_T, D_MODEL)),          # v cache out
        ],
        scratch_shapes=[pltpu.VMEM((1, D_MODEL), jnp.bfloat16)],  # x carry
    )
    call = pl.pallas_call(
        _decode_kernel,
        grid_spec=grid_spec,
        out_shape=(jax.ShapeDtypeStruct((n_steps, V_PAD), jnp.float32),
                   jax.ShapeDtypeStruct((MAX_T, D_MODEL), jnp.float32),
                   jax.ShapeDtypeStruct((MAX_T, D_MODEL), jnp.float32)),
        compiler_params=pltpu.CompilerParams(
            dimension_semantics=("arbitrary",)),   # steps are sequential
    )
    # TODO(synk): for v7x, add a leading "parallel" grid axis over batched
    # decode streams to use the second TensorCore; single stream here.

    @jax.jit
    def decode(x0, k_cache, v_cache, pos0, fused):
        pos_arr = jnp.reshape(jnp.asarray(pos0, jnp.int32), (1,))
        return call(pos_arr, x0, k_cache, v_cache, fused['embed'],
                    fused['wa'], fused['ba'], fused['wof1'], fused['bof1'],
                    fused['w2lm'], fused['b2lm'])

    return decode


def init_params(key, vocab_size):
    """Deterministic synthetic parameters with PyTorch-compatible shapes."""
    keys = jax.random.split(key, 10)

    def lin(k, din, dout):
        k1, k2 = jax.random.split(k)
        w = jax.random.normal(k1, (dout, din), jnp.float32) * 0.02  # torch (out,in)
        b = jax.random.normal(k2, (dout,), jnp.float32) * 0.02
        return w.T, b.reshape(1, -1)                                # kernel layout

    embed = jax.random.normal(keys[0], (vocab_size, D_MODEL), jnp.float32) * 0.02
    wq, bq = lin(keys[1], D_MODEL, D_MODEL)
    wk, bk = lin(keys[2], D_MODEL, D_MODEL)
    wv, bv = lin(keys[3], D_MODEL, D_MODEL)
    in_w = jax.random.normal(keys[4], (3 * D_MODEL, D_MODEL), jnp.float32) * 0.02
    in_b = jax.random.normal(keys[5], (3 * D_MODEL,), jnp.float32) * 0.02
    wiq, wik, wiv = (in_w[:D_MODEL].T, in_w[D_MODEL:2 * D_MODEL].T,
                     in_w[2 * D_MODEL:].T)
    biq = in_b[:D_MODEL].reshape(1, -1)
    bik = in_b[D_MODEL:2 * D_MODEL].reshape(1, -1)
    biv = in_b[2 * D_MODEL:].reshape(1, -1)
    wo, bo = lin(keys[6], D_MODEL, D_MODEL)
    w1, b1 = lin(keys[7], D_MODEL, FFN_DIM)
    w2, b2 = lin(keys[8], FFN_DIM, D_MODEL)
    wlm, blm = lin(keys[9], D_MODEL, vocab_size)
    params = (wq, bq, wk, bk, wv, bv, wiq, biq, wik, bik, wiv, biv,
              wo, bo, w1, b1, w2, b2, wlm, blm)
    return embed, params


def fuse_params(embed, params):
    """Pre-compose linear chains, pad to lane-dense shapes, cast weights bf16."""
    (wq, bq, wk, bk, wv, bv, wiq, biq, wik, bik, wiv, biv,
     wo, bo, w1, b1, w2, b2, wlm, blm) = params
    vocab = wlm.shape[1]
    # Column order [ki | vi | qi]: the 128-wide cache block starts at lane 0,
    # q starts at lane 128 (a vreg boundary).
    wa = jnp.concatenate([wk @ wik, wv @ wiv, wq @ wiq], axis=1)          # (64,192)
    ba = jnp.concatenate([bk @ wik + bik, bv @ wiv + biv, bq @ wiq + biq], axis=1)
    wof1 = wo @ w1                                                        # (64,256)
    bof1 = bo @ w1 + b1
    w2lm = jnp.pad(w2 @ wlm, ((0, 0), (0, V_PAD - vocab)))                # (256,128)
    b2lm = jnp.pad(b2 @ wlm + blm, ((0, 0), (0, V_PAD - vocab)),
                   constant_values=-1e9)       # padded lanes never win argmax
    embed_pad = jnp.pad(embed, ((0, V_PAD - vocab), (0, 0)))              # (128,64)
    bf = lambda t: t.astype(jnp.bfloat16)
    return dict(wa=bf(wa), ba=ba, wof1=bf(wof1), bof1=bof1,
                w2lm=bf(w2lm), b2lm=b2lm, embed=bf(embed_pad))


def reference_forward(x_emb, past_kv, params):
    """Pure-JAX reference mirroring the PyTorch forward (raw K/V cache)."""
    (wq, bq, wk, bk, wv, bv, wiq, biq, wik, bik, wiv, biv,
     wo, bo, w1, b1, w2, b2, wlm, blm) = params
    S = x_emb.shape[0]
    q = x_emb @ wq + bq
    k_new = x_emb @ wk + bk
    v_new = x_emb @ wv + bv
    if past_kv is None:
        k_full, v_full = k_new, v_new
    else:
        k_full = jnp.concatenate([past_kv[0], k_new], 0)
        v_full = jnp.concatenate([past_kv[1], v_new], 0)
    T = k_full.shape[0]
    qi = q @ wiq + biq
    ki = k_full @ wik + bik
    vi = v_full @ wiv + biv
    if S > 1:
        rows = jnp.arange(S)[:, None]
        cols = jnp.arange(T)[None, :]
        masked = (cols >= (T - S)) if past_kv is not None else (cols > rows)
        bias = jnp.where(masked, -1e30, 0.0)
    else:
        bias = jnp.zeros((S, T), jnp.float32)
    outs = []
    for h in range(N_HEAD):
        sl = slice(h * HEAD_DIM, (h + 1) * HEAD_DIM)
        sc = (qi[:, sl] @ ki[:, sl].T) / math.sqrt(HEAD_DIM) + bias
        outs.append(jax.nn.softmax(sc, axis=-1) @ vi[:, sl])
    attn = jnp.concatenate(outs, -1) @ wo + bo
    ffn = jnp.maximum(attn @ w1 + b1, 0.0) @ w2 + b2
    return ffn @ wlm + blm, (k_full, v_full)


if __name__ == "__main__":
    # Same char vocabulary as the demo's CharTokenizer.
    corpus = '中国的首都位于北京<EOS>北京是政治文化中心<EOS>首都有天安门<EOS>'
    chars = ['<PAD>', '<EOS>'] + sorted(set(corpus))
    vocab = {c: i for i, c in enumerate(chars)}
    vocab_size = len(chars)
    assert vocab_size <= V_PAD

    embed, params = init_params(jax.random.PRNGKey(0), vocab_size)
    (wq, bq, wk, bk, wv, bv, wiq, biq, wik, bik, wiv, biv,
     wo, bo, w1, b1, w2, b2, wlm, blm) = params
    fused = fuse_params(embed, params)

    prompt = '中国的首都位于北'                  # seq_len = 8
    tokens = jnp.asarray([vocab[c] for c in prompt], jnp.int32)
    prompt_len = int(tokens.shape[0])
    n_decode = 6
    assert prompt_len + n_decode <= MAX_T, "KV cache capacity exceeded"

    # TODO(synk): prompt embedding lookup (row gather) is plain-JAX glue.
    x_emb = embed[tokens]                       # (8, 64) f32

    prefill = make_prefill(prompt_len)
    decode = make_decode(n_decode)

    # ---- prefill: causal mask in-kernel, projected K/V written to cache ----
    logits_pf, k_cache, v_cache = prefill(x_emb.astype(jnp.bfloat16), fused)
    jax.block_until_ready(logits_pf)

    ref_logits, (ref_k, ref_v) = reference_forward(x_emb, None, params)
    assert jnp.allclose(logits_pf[:, :vocab_size], ref_logits,
                        atol=2e-3, rtol=2e-2), "prefill logits mismatch"
    assert jnp.allclose(k_cache[:prompt_len], ref_k @ wik + bik,
                        atol=2e-3, rtol=2e-2), "prefill K cache mismatch"
    assert jnp.allclose(v_cache[:prompt_len], ref_v @ wiv + biv,
                        atol=2e-3, rtol=2e-2), "prefill V cache mismatch"

    # ---- fused greedy decode: ONE pallas_call generates all n_decode tokens ----
    tok0 = int(jnp.argmax(logits_pf[-1, :vocab_size]))
    x0 = fused['embed'][tok0][None, :]          # (1, 64) bf16
    logits_dec, k_cache, v_cache = decode(x0, k_cache, v_cache,
                                          prompt_len, fused)
    jax.block_until_ready(logits_dec)

    # Validate every fused step against the reference on the kernel's own
    # greedy trajectory (wrapper argmax over the kernel logits reproduces the
    # in-kernel first-occurrence argmax exactly).
    cur_k, cur_v = ref_k, ref_v
    tok_in = tok0
    for i in range(n_decode):
        x1 = embed[tok_in][None, :]
        ref_logits1, (cur_k, cur_v) = reference_forward(x1, (cur_k, cur_v), params)
        assert jnp.allclose(logits_dec[i, :vocab_size], ref_logits1[0],
                            atol=2e-3, rtol=2e-2), f"decode step {i} mismatch"
        tok_in = int(jnp.argmax(logits_dec[i, :vocab_size]))

    total = prompt_len + n_decode
    assert jnp.allclose(k_cache[:total], cur_k @ wik + bik,
                        atol=2e-3, rtol=2e-2), "final K cache mismatch"
    assert jnp.allclose(v_cache[:total], cur_v @ wiv + biv,
                        atol=2e-3, rtol=2e-2), "final V cache mismatch"

    jax.block_until_ready((k_cache, v_cache))
    print("KERNEL_OK")
</pallas_src>

<mosaic_0001>
module attributes {stable_mosaic.version = 11 : i64} {
  func.func @_prefill_kernel(%arg0: memref<8x64xbf16, #tpu.memory_space<vmem>>, %arg1: memref<64x192xbf16, #tpu.memory_space<vmem>>, %arg2: memref<1x192xf32, #tpu.memory_space<vmem>>, %arg3: memref<64x256xbf16, #tpu.memory_space<vmem>>, %arg4: memref<1x256xf32, #tpu.memory_space<vmem>>, %arg5: memref<256x128xbf16, #tpu.memory_space<vmem>>, %arg6: memref<1x128xf32, #tpu.memory_space<vmem>>, %arg7: memref<8x128xf32, #tpu.memory_space<vmem>>, %arg8: memref<64x64xf32, #tpu.memory_space<vmem>>, %arg9: memref<64x64xf32, #tpu.memory_space<vmem>>) attributes {dimension_semantics = [], scalar_prefetch = 0 : i64, scratch_operands = 0 : i64, tpu.core_type = #tpu.core_type<tc>} {
    %c0 = arith.constant 0 : index
    %c0_0 = arith.constant 0 : index
    %0 = vector.load %arg0[%c0, %c0_0] : memref<8x64xbf16, #tpu.memory_space<vmem>>, vector<8x64xbf16>
    %c0_1 = arith.constant 0 : index
    %c0_2 = arith.constant 0 : index
    %1 = vector.load %arg1[%c0_1, %c0_2] : memref<64x192xbf16, #tpu.memory_space<vmem>>, vector<64x192xbf16>
    %cst = arith.constant dense<0.000000e+00> : vector<8x192xf32>
    %2 = tpu.matmul %0, %1, %cst {dimension_numbers = #tpu.dot_dimension_numbers<[1], [0], [0], [1], [0, 0, 1, 1], [], []>} : vector<8x64xbf16>, vector<64x192xbf16>, vector<8x192xf32> -> vector<8x192xf32>
    %c0_3 = arith.constant 0 : index
    %c0_4 = arith.constant 0 : index
    %3 = vector.load %arg2[%c0_3, %c0_4] : memref<1x192xf32, #tpu.memory_space<vmem>>, vector<1x192xf32>
    %4 = vector.broadcast %3 : vector<1x192xf32> to vector<8x192xf32>
    %5 = arith.addf %2, %4 : vector<8x192xf32>
    %6 = vector.extract_strided_slice %5 {offsets = [0, 0], sizes = [8, 64], strides = [1, 1]} : vector<8x192xf32> to vector<8x64xf32>
    %7 = vector.extract_strided_slice %5 {offsets = [0, 64], sizes = [8, 64], strides = [1, 1]} : vector<8x192xf32> to vector<8x64xf32>
    %8 = vector.extract_strided_slice %5 {offsets = [0, 128], sizes = [8, 64], strides = [1, 1]} : vector<8x192xf32> to vector<8x64xf32>
    %cst_5 = arith.constant 0.000000e+00 : f32
    %9 = vector.broadcast %cst_5 : f32 to vector<64x64xf32>
    %c0_6 = arith.constant 0 : index
    %c0_7 = arith.constant 0 : index
    %10 = vector.load %arg8[%c0_6, %c0_7] : memref<64x64xf32, #tpu.memory_space<vmem>>, vector<64x64xf32>
    tpu.vector_store %arg8[%c0_6, %c0_7], %9 {strides = array<i32>} : memref<64x64xf32, #tpu.memory_space<vmem>>, vector<64x64xf32>,
    %cst_8 = arith.constant 0.000000e+00 : f32
    %11 = vector.broadcast %cst_8 : f32 to vector<64x64xf32>
    %c0_9 = arith.constant 0 : index
    %c0_10 = arith.constant 0 : index
    %12 = vector.load %arg9[%c0_9, %c0_10] : memref<64x64xf32, #tpu.memory_space<vmem>>, vector<64x64xf32>
    tpu.vector_store %arg9[%c0_9, %c0_10], %11 {strides = array<i32>} : memref<64x64xf32, #tpu.memory_space<vmem>>, vector<64x64xf32>,
    %c0_11 = arith.constant 0 : index
    %c0_12 = arith.constant 0 : index
    %13 = vector.load %arg8[%c0_11, %c0_12] : memref<64x64xf32, #tpu.memory_space<vmem>>, vector<8x64xf32>
    tpu.vector_store %arg8[%c0_11, %c0_12], %6 {strides = array<i32>} : memref<64x64xf32, #tpu.memory_space<vmem>>, vector<8x64xf32>,
    %c0_13 = arith.constant 0 : index
    %c0_14 = arith.constant 0 : index
    %14 = vector.load %arg9[%c0_13, %c0_14] : memref<64x64xf32, #tpu.memory_space<vmem>>, vector<8x64xf32>
    tpu.vector_store %arg9[%c0_13, %c0_14], %7 {strides = array<i32>} : memref<64x64xf32, #tpu.memory_space<vmem>>, vector<8x64xf32>,
    %15 = tpu.iota {dimensions = array<i32: 0>} : vector<8x8xi32>
    %16 = tpu.iota {dimensions = array<i32: 1>} : vector<8x8xi32>
    %17 = arith.cmpi sgt, %16, %15 : vector<8x8xi32>
    %cst_15 = arith.constant -1.000000e+30 : f32
    %cst_16 = arith.constant 0.000000e+00 : f32
    %18 = vector.broadcast %cst_15 : f32 to vector<8x8xf32>
    %19 = vector.broadcast %cst_16 : f32 to vector<8x8xf32>
    %20 = arith.select %17, %18, %19 : vector<8x8xi1>, vector<8x8xf32>
    %21 = vector.extract_strided_slice %8 {offsets = [0, 0], sizes = [8, 32], strides = [1, 1]} : vector<8x64xf32> to vector<8x32xf32>
    %22 = arith.truncf %21 : vector<8x32xf32> to vector<8x32xbf16>
    %23 = vector.extract_strided_slice %6 {offsets = [0, 0], sizes = [8, 32], strides = [1, 1]} : vector<8x64xf32> to vector<8x32xf32>
    %24 = arith.truncf %23 : vector<8x32xf32> to vector<8x32xbf16>
    %25 = vector.extract_strided_slice %7 {offsets = [0, 0], sizes = [8, 32], strides = [1, 1]} : vector<8x64xf32> to vector<8x32xf32>
    %26 = arith.truncf %25 : vector<8x32xf32> to vector<8x32xbf16>
    %cst_17 = arith.constant dense<0.000000e+00> : vector<8x8xf32>
    %27 = tpu.matmul %22, %24, %cst_17 {dimension_numbers = #tpu.dot_dimension_numbers<[1], [1], [0], [0], [0, 0, 1, 0], [], []>} : vector<8x32xbf16>, vector<8x32xbf16>, vector<8x8xf32> -> vector<8x8xf32>
    %cst_18 = arith.constant 0.176776692 : f32
    %28 = vector.broadcast %cst_18 : f32 to vector<8x8xf32>
    %29 = arith.mulf %27, %28 : vector<8x8xf32>
    %30 = arith.addf %29, %20 : vector<8x8xf32>
    %cst_19 = arith.constant dense<0xFF800000> : vector<8xf32>
    %31 = vector.multi_reduction <maximumf>, %30, %cst_19 [1] : vector<8x8xf32> to vector<8xf32>
    %32 = vector.shape_cast %31 : vector<8xf32> to vector<8x1xf32>
    %33 = vector.broadcast %32 : vector<8x1xf32> to vector<8x8xf32>
    %34 = arith.subf %30, %33 : vector<8x8xf32>
    %35 = math.exp %34 : vector<8x8xf32>
    %cst_20 = arith.constant dense<0.000000e+00> : vector<8xf32>
    %36 = vector.multi_reduction <add>, %35, %cst_20 [1] : vector<8x8xf32> to vector<8xf32>
    %37 = vector.shape_cast %36 : vector<8xf32> to vector<8x1xf32>
    %38 = tpu.reciprocal %37 {approx = true} : vector<8x1xf32> -> vector<8x1xf32>
    %39 = vector.broadcast %38 : vector<8x1xf32> to vector<8x8xf32>
    %40 = arith.mulf %35, %39 : vector<8x8xf32>
    %41 = arith.truncf %40 : vector<8x8xf32> to vector<8x8xbf16>
    %cst_21 = arith.constant dense<0.000000e+00> : vector<8x32xf32>
    %42 = tpu.matmul %41, %26, %cst_21 {dimension_numbers = #tpu.dot_dimension_numbers<[1], [0], [0], [1], [0, 0, 1, 1], [], []>} : vector<8x8xbf16>, vector<8x32xbf16>, vector<8x32xf32> -> vector<8x32xf32>
    %43 = vector.extract_strided_slice %8 {offsets = [0, 32], sizes = [8, 32], strides = [1, 1]} : vector<8x64xf32> to vector<8x32xf32>
    %44 = arith.truncf %43 : vector<8x32xf32> to vector<8x32xbf16>
    %45 = vector.extract_strided_slice %6 {offsets = [0, 32], sizes = [8, 32], strides = [1, 1]} : vector<8x64xf32> to vector<8x32xf32>
    %46 = arith.truncf %45 : vector<8x32xf32> to vector<8x32xbf16>
    %47 = vector.extract_strided_slice %7 {offsets = [0, 32], sizes = [8, 32], strides = [1, 1]} : vector<8x64xf32> to vector<8x32xf32>
    %48 = arith.truncf %47 : vector<8x32xf32> to vector<8x32xbf16>
    %cst_22 = arith.constant dense<0.000000e+00> : vector<8x8xf32>
    %49 = tpu.matmul %44, %46, %cst_22 {dimension_numbers = #tpu.dot_dimension_numbers<[1], [1], [0], [0], [0, 0, 1, 0], [], []>} : vector<8x32xbf16>, vector<8x32xbf16>, vector<8x8xf32> -> vector<8x8xf32>
    %cst_23 = arith.constant 0.176776692 : f32
    %50 = vector.broadcast %cst_23 : f32 to vector<8x8xf32>
    %51 = arith.mulf %49, %50 : vector<8x8xf32>
    %52 = arith.addf %51, %20 : vector<8x8xf32>
    %cst_24 = arith.constant dense<0xFF800000> : vector<8xf32>
    %53 = vector.multi_reduction <maximumf>, %52, %cst_24 [1] : vector<8x8xf32> to vector<8xf32>
    %54 = vector.shape_cast %53 : vector<8xf32> to vector<8x1xf32>
    %55 = vector.broadcast %54 : vector<8x1xf32> to vector<8x8xf32>
    %56 = arith.subf %52, %55 : vector<8x8xf32>
    %57 = math.exp %56 : vector<8x8xf32>
    %cst_25 = arith.constant dense<0.000000e+00> : vector<8xf32>
    %58 = vector.multi_reduction <add>, %57, %cst_25 [1] : vector<8x8xf32> to vector<8xf32>
    %59 = vector.shape_cast %58 : vector<8xf32> to vector<8x1xf32>
    %60 = tpu.reciprocal %59 {approx = true} : vector<8x1xf32> -> vector<8x1xf32>
    %61 = vector.broadcast %60 : vector<8x1xf32> to vector<8x8xf32>
    %62 = arith.mulf %57, %61 : vector<8x8xf32>
    %63 = arith.truncf %62 : vector<8x8xf32> to vector<8x8xbf16>
    %cst_26 = arith.constant dense<0.000000e+00> : vector<8x32xf32>
    %64 = tpu.matmul %63, %48, %cst_26 {dimension_numbers = #tpu.dot_dimension_numbers<[1], [0], [0], [1], [0, 0, 1, 1], [], []>} : vector<8x8xbf16>, vector<8x32xbf16>, vector<8x32xf32> -> vector<8x32xf32>
    %65 = tpu.concatenate %42, %64 in 1 : vector<8x32xf32>, vector<8x32xf32> -> vector<8x64xf32>
    %66 = arith.truncf %65 : vector<8x64xf32> to vector<8x64xbf16>
    %c0_27 = arith.constant 0 : index
    %c0_28 = arith.constant 0 : index
    %67 = vector.load %arg3[%c0_27, %c0_28] : memref<64x256xbf16, #tpu.memory_space<vmem>>, vector<64x256xbf16>
    %cst_29 = arith.constant dense<0.000000e+00> : vector<8x256xf32>
    %68 = tpu.matmul %66, %67, %cst_29 {dimension_numbers = #tpu.dot_dimension_numbers<[1], [0], [0], [1], [0, 0, 1, 1], [], []>} : vector<8x64xbf16>, vector<64x256xbf16>, vector<8x256xf32> -> vector<8x256xf32>
    %c0_30 = arith.constant 0 : index
    %c0_31 = arith.constant 0 : index
    %69 = vector.load %arg4[%c0_30, %c0_31] : memref<1x256xf32, #tpu.memory_space<vmem>>, vector<1x256xf32>
    %70 = vector.broadcast %69 : vector<1x256xf32> to vector<8x256xf32>
    %71 = arith.addf %68, %70 : vector<8x256xf32>
    %cst_32 = arith.constant 0.000000e+00 : f32
    %72 = vector.broadcast %cst_32 : f32 to vector<8x256xf32>
    %73 = arith.maximumf %71, %72 : vector<8x256xf32>
    %74 = arith.truncf %73 : vector<8x256xf32> to vector<8x256xbf16>
    %c0_33 = arith.constant 0 : index
    %c0_34 = arith.constant 0 : index
    %75 = vector.load %arg5[%c0_33, %c0_34] : memref<256x128xbf16, #tpu.memory_space<vmem>>, vector<256x128xbf16>
    %cst_35 = arith.constant dense<0.000000e+00> : vector<8x128xf32>
    %76 = tpu.matmul %74, %75, %cst_35 {dimension_numbers = #tpu.dot_dimension_numbers<[1], [0], [0], [1], [0, 0, 1, 1], [], []>} : vector<8x256xbf16>, vector<256x128xbf16>, vector<8x128xf32> -> vector<8x128xf32>
    %c0_36 = arith.constant 0 : index
    %c0_37 = arith.constant 0 : index
    %77 = vector.load %arg6[%c0_36, %c0_37] : memref<1x128xf32, #tpu.memory_space<vmem>>, vector<1x128xf32>
    %78 = vector.broadcast %77 : vector<1x128xf32> to vector<8x128xf32>
    %79 = arith.addf %76, %78 : vector<8x128xf32>
    %c0_38 = arith.constant 0 : index
    %c0_39 = arith.constant 0 : index
    %80 = vector.load %arg7[%c0_38, %c0_39] : memref<8x128xf32, #tpu.memory_space<vmem>>, vector<8x128xf32>
    tpu.vector_store %arg7[%c0_38, %c0_39], %79 {strides = array<i32>} : memref<8x128xf32, #tpu.memory_space<vmem>>, vector<8x128xf32>,
    return
  }
}

</mosaic_0001>

<llo_original>
// kernel: prefill.1
$region0: #{prefill.1}
  #allocation0 [shape = 'u32[]', space=smem, size = 0x4, offset = 0x4, fixed_abs, tag = 'smem constant byte address 0x4 - core index']
  #allocation1 [shape = 'u32[144,128]{1,0:T(1,128)}', space=vmem, size = 0x12000, scoped, tag = 'internal scratch']
  %s0 = inlined_call_operand.hbm [shape: bf16[8,64], index: 0, kind: input, shape index: {}]
  %s1 = inlined_call_operand.hbm [shape: bf16[64,192], index: 1, kind: input, shape index: {}]
  %s2 = inlined_call_operand.vmem [shape: f32[1,192], index: 2, kind: input, shape index: {}]
  %s3 = inlined_call_operand.hbm [shape: bf16[64,256], index: 3, kind: input, shape index: {}]
  %s4 = inlined_call_operand.vmem [shape: f32[1,256], index: 4, kind: input, shape index: {}]
  %s5 = inlined_call_operand.hbm [shape: bf16[256,128], index: 5, kind: input, shape index: {}]
  %s6 = inlined_call_operand.vmem [shape: f32[1,128], index: 6, kind: input, shape index: {}]
  %s7 = inlined_call_operand.hbm [shape: f32[8,128], index: 7, kind: output, shape index: {0}]
  %s8 = inlined_call_operand.hbm [shape: f32[64,64], index: 8, kind: output, shape index: {1}]
  %s9 = inlined_call_operand.hbm [shape: f32[64,64], index: 9, kind: output, shape index: {2}]
  %10 = xla_tuple %s7, %s8, %s9
  %s11 = sld [smem:[#allocation0]]
  $region70: #{prefill.1} parent=0
    _
  %s13 = ssub.s32 1, %s11
  %s14 = scalar_select 0, %s13, %s11
  $region1: #{prefill.1} parent=0
    #allocation2 [shape = 'u8[2048]{0}', space=vmem, size = 0x800, scoped, tag = 'input window, operand 0, single buffered']
    #allocation3 [shape = 's32[1]{0}', space=sflag, size = 0x4, scoped, tag = 'scoped memory for prefill.1']
    #allocation4 [shape = 's32[1]{0}', space=sflag, size = 0x4, scoped, tag = 'scoped memory for prefill.1']
    #allocation5 [shape = 'u8[32768]{0}', space=vmem, size = 0x8000, scoped, tag = 'input window, operand 1, single buffered']
    #allocation6 [shape = 's32[1]{0}', space=sflag, size = 0x4, scoped, tag = 'scoped memory for prefill.1']
    #allocation7 [shape = 'u8[32768]{0}', space=vmem, size = 0x8000, scoped, tag = 'input window, operand 3, single buffered']
    #allocation8 [shape = 'u8[65536]{0}', space=vmem, size = 0x10000, scoped, tag = 'input window, operand 5, single buffered']
    #allocation9 [shape = 's32[1]{0}', space=sflag, size = 0x4, scoped, tag = 'scoped memory for prefill.1']
    #allocation10 [shape = 'u8[4096]{0}', space=vmem, size = 0x1000, scoped, tag = 'output window, operand 0, single buffered']
    #allocation11 [shape = 'u8[32768]{0}', space=vmem, size = 0x8000, scoped, tag = 'output window, operand 1, single buffered']
    #allocation12 [shape = 's32[1]{0}', space=sflag, size = 0x4, scoped, tag = 'scoped memory for prefill.1']
    #allocation13 [shape = 'u8[32768]{0}', space=vmem, size = 0x8000, scoped, tag = 'output window, operand 2, single buffered']
    %15 = vsyncpa [#allocation3], 0
    %16 = vsyncpa [#allocation6], 0
    %17 = vsyncpa [#allocation9], 0
    %18 = vsyncpa [#allocation4], 0
    %19 = vsyncpa [#allocation12], 0
    // Predicated region
    $region2: #{prefill.1} parent=1 // pred_check
      _
    $region3: #{prefill.1} parent=1 // pred_check_branch
      %21 = sbr.rel (0) target = $region5
    $region4: #{prefill.1} parent=1 // pred_region
      %s23 = ssub.s32 64, 64
      %24 = vsyncadd [#allocation3], %s23
      %s26 = sshll.u32 [#allocation2], 4
      %s27 = int_to_ptr.vmem [resolvable:$true] %s26
      %29 = dma.hbm_to_vmem [thread:$0]  %s0, 64, %s27, [#allocation3]
    $region5: #{prefill.1} parent=1 // pred_fallthru
      _
    // Predicated region
    $region6: #{prefill.1} parent=1 // pred_check
      _
    $region7: #{prefill.1} parent=1 // pred_check_branch
      %31 = sbr.rel (0) target = $region9
    $region8: #{prefill.1} parent=1 // pred_region
      %s33 = ssub.s32 1024, 1024
      %34 = vsyncadd [#allocation6], %s33
      %s35 = sshll.u32 [#allocation5], 4
      %s36 = int_to_ptr.vmem [resolvable:$true] %s35
      %41 = dma.hbm_to_vmem [thread:$0]  %s1, 1024, %s36, [#allocation6], 128, 128, 8
    $region9: #{prefill.1} parent=1 // pred_fallthru
      _
    // Predicated region
    $region10: #{prefill.1} parent=1 // pred_check
      _
    $region11: #{prefill.1} parent=1 // pred_check_branch
      %43 = sbr.rel (0) target = $region13
    $region12: #{prefill.1} parent=1 // pred_region
      _
    $region13: #{prefill.1} parent=1 // pred_fallthru
      _
    // Predicated region
    $region14: #{prefill.1} parent=1 // pred_check
      _
    $region15: #{prefill.1} parent=1 // pred_check_branch
      %45 = sbr.rel (0) target = $region17
    $region16: #{prefill.1} parent=1 // pred_region
      %s47 = ssub.s32 1024, 1024
      %48 = vsyncadd [#allocation6], %s47
      %s49 = sshll.u32 [#allocation7], 4
      %s50 = int_to_ptr.vmem [resolvable:$true] %s49
      %55 = dma.hbm_to_vmem [thread:$0]  %s3, 1024, %s50, [#allocation6], 128, 128, 8
    $region17: #{prefill.1} parent=1 // pred_fallthru
      _
    // Predicated region
    $region18: #{prefill.1} parent=1 // pred_check
      _
    $region19: #{prefill.1} parent=1 // pred_check_branch
      %57 = sbr.rel (0) target = $region21
    $region20: #{prefill.1} parent=1 // pred_region
      _
    $region21: #{prefill.1} parent=1 // pred_fallthru
      _
    // Predicated region
    $region22: #{prefill.1} parent=1 // pred_check
      _
    $region23: #{prefill.1} parent=1 // pred_check_branch
      %59 = sbr.rel (0) target = $region25
    $region24: #{prefill.1} parent=1 // pred_region
      %s61 = ssub.s32 2048, 2048
      %62 = vsyncadd [#allocation9], %s61
      %s63 = sshll.u32 [#allocation8], 4
      %s64 = int_to_ptr.vmem [resolvable:$true] %s63
      %69 = dma.hbm_to_vmem [thread:$0]  %s5, 2048, %s64, [#allocation9], 64, 64, 4
    $region25: #{prefill.1} parent=1 // pred_fallthru
      _
    // Predicated region
    $region26: #{prefill.1} parent=1 // pred_check
      _
    $region27: #{prefill.1} parent=1 // pred_check_branch
      %71 = sbr.rel (0) target = $region29
    $region28: #{prefill.1} parent=1 // pred_region
      _
    $region29: #{prefill.1} parent=1 // pred_fallthru
      _
    // Predicated region
    $region30: #{prefill.1} parent=1 // pred_check
      _
    $region31: #{prefill.1} parent=1 // pred_check_branch
      %73 = sbr.rel (0) target = $region33
    $region32: #{prefill.1} parent=1 // pred_region
      %74 = dma.done [#allocation3], 64
    $region33: #{prefill.1} parent=1 // pred_fallthru
      _
    // Predicated region
    $region34: #{prefill.1} parent=1 // pred_check
      _
    $region35: #{prefill.1} parent=1 // pred_check_branch
      %76 = sbr.rel (0) target = $region37
    $region36: #{prefill.1} parent=1 // pred_region
      %77 = dma.done [#allocation6], 1024
    $region37: #{prefill.1} parent=1 // pred_fallthru
      _
    // Predicated region
    $region38: #{prefill.1} parent=1 // pred_check
      _
    $region39: #{prefill.1} parent=1 // pred_check_branch
      %79 = sbr.rel (0) target = $region41
    $region40: #{prefill.1} parent=1 // pred_region
      %80 = dma.done [#allocation6], 1024
    $region41: #{prefill.1} parent=1 // pred_fallthru
      _
    // Predicated region
    $region42: #{prefill.1} parent=1 // pred_check
      _
    $region43: #{prefill.1} parent=1 // pred_check_branch
      %82 = sbr.rel (0) target = $region45
    $region44: #{prefill.1} parent=1 // pred_region
      %83 = dma.done [#allocation9], 2048
    $region45: #{prefill.1} parent=1 // pred_fallthru
      _
    %v85 = vld [vmem:[#allocation2] sm:$0xf]
    %v86 = vld [vmem:[#allocation5] sm:$0xff]
    %v87 = vld [vmem:[#allocation5 + $0x8] sm:$0xff]
    %v88 = vld [vmem:[#allocation5 + $0x10] sm:$0xff]
    %v89 = vld [vmem:[#allocation5 + $0x18] sm:$0xff]
    %v90 = vld [vmem:[#allocation5 + $0x20] sm:$0xff]
    %v91 = vld [vmem:[#allocation5 + $0x28] sm:$0xff]
    %v92 = vld [vmem:[#allocation5 + $0x30] sm:$0xff]
    %v93 = vld [vmem:[#allocation5 + $0x38] sm:$0xff]
    %v94 = vld [vmem:[%s2] sm:$0x3]
    %v96 = vlaneseq
    %v97 = vshrl.u32 %v96, 7
    %v98 = vsub.s32 0, %v97
    %v99 = vrot.slane %v94, %v98
    %v100 = vlaneseq
    %v101 = vshrl.u32 %v100, 7
    %v102 = vsub.s32 1, %v101
    %v103 = vrot.slane %v94, %v102
    %v114 = vunpack.c.l.b16 %v86
    %v115 = vunpack.c.h.b16 %v86
    %v116 = vunpack.c.l.b16 %v87
    %v117 = vunpack.c.h.b16 %v87
    %v118 = vunpack.c.l.b16 %v88
    %v119 = vunpack.c.h.b16 %v88
    %v120 = vunpack.c.l.b16 %v89
    %v121 = vunpack.c.h.b16 %v89
    %v122 = vunpack.c.l.b16 %v90
    %v123 = vunpack.c.h.b16 %v90
    %v124 = vunpack.c.l.b16 %v91
    %v125 = vunpack.c.h.b16 %v91
    %v126 = vunpack.c.l.b16 %v92
    %v127 = vunpack.c.h.b16 %v92
    %v128 = vunpack.c.l.b16 %v93
    %v129 = vunpack.c.h.b16 %v93
    %v130 = vpack.c.b16 %v116, %v114
    %v131 = vpack.c.b16 %v117, %v115
    %v132 = vpack.c.b16 %v120, %v118
    %v133 = vpack.c.b16 %v121, %v119
    %v134 = vpack.c.b16 %v124, %v122
    %v135 = vpack.c.b16 %v125, %v123
    %v136 = vpack.c.b16 %v128, %v126
    %v137 = vpack.c.b16 %v129, %v127
    %vm146 = vcmask 523264
    %v148 = vsel %vm146, %v85, 0
    %150 = vmatprep.subr.bf16.mxu0 %v131
    %151 = vmatpush1.bf16.msra.mxu0 %v130
    %152 = vmatprep.subr.bf16.mxu0 %v133
    %153 = vmatpush1.bf16.msra.mxu0 %v132
    %154 = vmatprep.subr.bf16.mxu0 %v135
    %155 = vmatpush1.bf16.msra.mxu0 %v134
    %156 = vmatprep.subr.bf16.mxu0 %v137
    %157 = vmatpush1.bf16.msra.mxu0 %v136
    %158 = vmatprep.subr.bf16.mxu0 0
    %159 = vmatpush1.bf16.msra.mxu0 0
    %160 = vmatprep.subr.bf16.mxu0 0
    %161 = vmatpush1.bf16.msra.mxu0 0
    %162 = vmatprep.subr.bf16.mxu0 0
    %163 = vmatpush1.bf16.msra.mxu0 0
    %164 = vmatprep.subr.bf16.mxu0 0
    %165 = vmatpush1.bf16.msra.mxu0 0
    %166 = vmatprep.subr.bf16.mxu0 0
    %167 = vmatpush1.bf16.msra.mxu0 0
    %168 = vmatprep.subr.bf16.mxu0 0
    %169 = vmatpush1.bf16.msra.mxu0 0
    %170 = vmatprep.subr.bf16.mxu0 0
    %171 = vmatpush1.bf16.msra.mxu0 0
    %172 = vmatprep.subr.bf16.mxu0 0
    %173 = vmatpush1.bf16.msra.mxu0 0
    %174 = vmatprep.subr.bf16.mxu0 0
    %175 = vmatpush1.bf16.msra.mxu0 0
    %176 = vmatprep.subr.bf16.mxu0 0
    %177 = vmatpush1.bf16.msra.mxu0 0
    %178 = vmatprep.subr.bf16.mxu0 0
    %179 = vmatpush1.bf16.msra.mxu0 0
    %180 = vmatprep.subr.bf16.mxu0 0
    %181 = vmatpush1.bf16.msra.mxu0 0
    %182 = vmatprep.mubr.bf16.mxu0 0
    %183 = vmatmul.mubr.bf16.gmra.mrb[0].mxu0 %v148
    %v184 = vpop.f32.mrb[0].mxu0
    %v185 = vadd.f32 %v99, %v184
    %v186 = vpop.f32.mrb[0].mxu0
    %v187 = vadd.f32 %v103, %v186
    %v188 = vpop.f32.mrb[0].mxu0
    %v189 = vpop.f32.mrb[0].mxu0
    %190 = vdwg.mxu0
    %191 = vst.msk [vmem:[#allocation11] sm:$0xff] %vm146, 0.0
    %192 = vst.msk [vmem:[#allocation11 + $0x8] sm:$0xff] %vm146, 0.0
    %193 = vst.msk [vmem:[#allocation11 + $0x10] sm:$0xff] %vm146, 0.0
    %194 = vst.msk [vmem:[#allocation11 + $0x18] sm:$0xff] %vm146, 0.0
    %195 = vst.msk [vmem:[#allocation11 + $0x20] sm:$0xff] %vm146, 0.0
    %196 = vst.msk [vmem:[#allocation11 + $0x28] sm:$0xff] %vm146, 0.0
    %197 = vst.msk [vmem:[#allocation11 + $0x30] sm:$0xff] %vm146, 0.0
    %198 = vst.msk [vmem:[#allocation11 + $0x38] sm:$0xff] %vm146, 0.0
    %199 = vst.msk [vmem:[#allocation13] sm:$0xff] %vm146, 0.0
    %200 = vst.msk [vmem:[#allocation13 + $0x8] sm:$0xff] %vm146, 0.0
    %201 = vst.msk [vmem:[#allocation13 + $0x10] sm:$0xff] %vm146, 0.0
    %202 = vst.msk [vmem:[#allocation13 + $0x18] sm:$0xff] %vm146, 0.0
    %203 = vst.msk [vmem:[#allocation13 + $0x20] sm:$0xff] %vm146, 0.0
    %204 = vst.msk [vmem:[#allocation13 + $0x28] sm:$0xff] %vm146, 0.0
    %205 = vst.msk [vmem:[#allocation13 + $0x30] sm:$0xff] %vm146, 0.0
    %206 = vst.msk [vmem:[#allocation13 + $0x38] sm:$0xff] %vm146, 0.0
    %207 = vst.msk [vmem:[#allocation11] sm:$0xff] %vm146, %v185
    %209 = vrot.lane.b32.xlu0 %v185, 64
    %v210 = vpop.permute.xlu0 %209
    %212 = vst.msk [vmem:[#allocation13] sm:$0xff] %vm146, %v210
    %v213 = vlaneseq
    %v214 = vshrl.u32 %v213, 7
    %v215 = vlaneseq
    %v216 = vand.u32 %v215, 127
    %vm217 = vcmp.gt.s32.totalorder %v216, %v214
    %v218 = vsel %vm217, -1e+30, 0.0
    %v219 = vpack.c.bf16 %v187, %v187
    %v220 = vpack.c.bf16 %v185, %v185
    %vm221 = vcmask 261120
    %v223 = vsel %vm221, %v219, 0
    %v226 = vsel %vm221, %v220, 0
    %228 = vmatprep.subr.bf16.mxu0 0
    %229 = vmatpush1.bf16.xpose.msra.mxu0 %v226
    %230 = vmatprep.subr.bf16.mxu0 0
    %231 = vmatpush1.bf16.xpose.msra.mxu0 0
    %232 = vmatprep.subr.bf16.mxu0 0
    %233 = vmatpush1.bf16.xpose.msra.mxu0 0
    %234 = vmatprep.subr.bf16.mxu0 0
    %235 = vmatpush1.bf16.xpose.msra.mxu0 0
    %236 = vmatprep.subr.bf16.mxu0 0
    %237 = vmatpush1.bf16.xpose.msra.mxu0 0
    %238 = vmatprep.subr.bf16.mxu0 0
    %239 = vmatpush1.bf16.xpose.msra.mxu0 0
    %240 = vmatprep.subr.bf16.mxu0 0
    %241 = vmatpush1.bf16.xpose.msra.mxu0 0
    %242 = vmatprep.subr.bf16.mxu0 0
    %243 = vmatpush1.bf16.xpose.msra.mxu0 0
    %244 = vmatprep.subr.bf16.mxu0 0
    %245 = vmatpush1.bf16.xpose.msra.mxu0 0
    %246 = vmatprep.subr.bf16.mxu0 0
    %247 = vmatpush1.bf16.xpose.msra.mxu0 0
    %248 = vmatprep.subr.bf16.mxu0 0
    %249 = vmatpush1.bf16.xpose.msra.mxu0 0
    %250 = vmatprep.subr.bf16.mxu0 0
    %251 = vmatpush1.bf16.xpose.msra.mxu0 0
    %252 = vmatprep.subr.bf16.mxu0 0
    %253 = vmatpush1.bf16.xpose.msra.mxu0 0
    %254 = vmatprep.subr.bf16.mxu0 0
    %255 = vmatpush1.bf16.xpose.msra.mxu0 0
    %256 = vmatprep.subr.bf16.mxu0 0
    %257 = vmatpush1.bf16.xpose.msra.mxu0 0
    %258 = vmatprep.subr.bf16.mxu0 0
    %259 = vmatpush1.bf16.xpose.msra.mxu0 0
    %260 = vmatprep.mubr.bf16.mxu0 0
    %261 = vmatmul.mubr.bf16.gmra.mrb[0].mxu0 %v223
    %v262 = vpop.f32.mrb[0].mxu0
    %v263 = vadd.f32 0.0, %v262
    %v264 = vpop.f32.mrb[0].mxu0
    %v265 = vpop.f32.mrb[0].mxu0
    %v266 = vpop.f32.mrb[0].mxu0
    %267 = vdwg.mxu0
    %v268 = vmul.f32 %v263, 0.17677669
    %v269 = vadd.f32 %v268, %v218
    %vm270 = vcmask 64512
    %v271 = vsel %vm270, %v269, -inf
    %272 = vmax.xlane.f32.xlu0 %v271
    %v273 = vpop.xlane.xlu0 %272
    %v274 = vsub.f32 %v269, %v273
    %v275 = vmul.f32 %v274, 1.442695
    %v276 = vpow.pop %v275
    %v277 = vsel %vm270, %v276, 0.0
    %278 = vadd.xlane.f32.xlu0 %v277
    %v279 = vpop.xlane.xlu0 %278
    %v280 = vrcp.pop %v279
    %v281 = vmul.f32 %v276, %v280
    %v282 = vpack.c.bf16 %v281, %v281
    %284 = vrot.lane.b32.xlu0 %v220, 64
    %v285 = vpop.permute.xlu0 %284
    %v287 = vsel %vm270, %v282, 0
    %vm289 = vcmask 1043456
    %v291 = vsel %vm289, %v285, 0
    %293 = vmatprep.subr.bf16.mxu0 0
    %294 = vmatpush1.bf16.msra.mxu0 %v291
    %295 = vmatprep.subr.bf16.mxu0 0
    %296 = vmatpush1.bf16.msra.mxu0 0
    %297 = vmatprep.subr.bf16.mxu0 0
    %298 = vmatpush1.bf16.msra.mxu0 0
    %299 = vmatprep.subr.bf16.mxu0 0
    %300 = vmatpush1.bf16.msra.mxu0 0
    %301 = vmatprep.subr.bf16.mxu0 0
    %302 = vmatpush1.bf16.msra.mxu0 0
    %303 = vmatprep.subr.bf16.mxu0 0
    %304 = vmatpush1.bf16.msra.mxu0 0
    %305 = vmatprep.subr.bf16.mxu0 0
    %306 = vmatpush1.bf16.msra.mxu0 0
    %307 = vmatprep.subr.bf16.mxu0 0
    %308 = vmatpush1.bf16.msra.mxu0 0
    %309 = vmatprep.subr.bf16.mxu0 0
    %310 = vmatpush1.bf16.msra.mxu0 0
    %311 = vmatprep.subr.bf16.mxu0 0
    %312 = vmatpush1.bf16.msra.mxu0 0
    %313 = vmatprep.subr.bf16.mxu0 0
    %314 = vmatpush1.bf16.msra.mxu0 0
    %315 = vmatprep.subr.bf16.mxu0 0
    %316 = vmatpush1.bf16.msra.mxu0 0
    %317 = vmatprep.subr.bf16.mxu0 0
    %318 = vmatpush1.bf16.msra.mxu0 0
    %319 = vmatprep.subr.bf16.mxu0 0
    %320 = vmatpush1.bf16.msra.mxu0 0
    %321 = vmatprep.subr.bf16.mxu0 0
    %322 = vmatpush1.bf16.msra.mxu0 0
    %323 = vmatprep.subr.bf16.mxu0 0
    %324 = vmatpush1.bf16.msra.mxu0 0
    %325 = vmatprep.mubr.bf16.mxu0 0
    %326 = vmatmul.mubr.bf16.gmra.mrb[0].mxu0 %v287
    %v327 = vpop.f32.mrb[0].mxu0
    %v328 = vadd.f32 0.0, %v327
    %v329 = vpop.f32.mrb[0].mxu0
    %v330 = vpop.f32.mrb[0].mxu0
    %v331 = vpop.f32.mrb[0].mxu0
    %332 = vdwg.mxu0
    %334 = vrot.lane.b32.xlu0 %v219, 96
    %v335 = vpop.permute.xlu0 %334
    %336 = vrot.lane.b32.xlu0 %v220, 96
    %v337 = vpop.permute.xlu0 %336
    %v339 = vsel %vm221, %v335, 0
    %v342 = vsel %vm221, %v337, 0
    %344 = vmatprep.subr.bf16.mxu0 0
    %345 = vmatpush1.bf16.xpose.msra.mxu0 %v342
    %346 = vmatprep.subr.bf16.mxu0 0
    %347 = vmatpush1.bf16.xpose.msra.mxu0 0
    %348 = vmatprep.subr.bf16.mxu0 0
    %349 = vmatpush1.bf16.xpose.msra.mxu0 0
    %350 = vmatprep.subr.bf16.mxu0 0
    %351 = vmatpush1.bf16.xpose.msra.mxu0 0
    %352 = vmatprep.subr.bf16.mxu0 0
    %353 = vmatpush1.bf16.xpose.msra.mxu0 0
    %354 = vmatprep.subr.bf16.mxu0 0
    %355 = vmatpush1.bf16.xpose.msra.mxu0 0
    %356 = vmatprep.subr.bf16.mxu0 0
    %357 = vmatpush1.bf16.xpose.msra.mxu0 0
    %358 = vmatprep.subr.bf16.mxu0 0
    %359 = vmatpush1.bf16.xpose.msra.mxu0 0
    %360 = vmatprep.subr.bf16.mxu0 0
    %361 = vmatpush1.bf16.xpose.msra.mxu0 0
    %362 = vmatprep.subr.bf16.mxu0 0
    %363 = vmatpush1.bf16.xpose.msra.mxu0 0
    %364 = vmatprep.subr.bf16.mxu0 0
    %365 = vmatpush1.bf16.xpose.msra.mxu0 0
    %366 = vmatprep.subr.bf16.mxu0 0
    %367 = vmatpush1.bf16.xpose.msra.mxu0 0
    %368 = vmatprep.subr.bf16.mxu0 0
    %369 = vmatpush1.bf16.xpose.msra.mxu0 0
    %370 = vmatprep.subr.bf16.mxu0 0
    %371 = vmatpush1.bf16.xpose.msra.mxu0 0
    %372 = vmatprep.subr.bf16.mxu0 0
    %373 = vmatpush1.bf16.xpose.msra.mxu0 0
    %374 = vmatprep.subr.bf16.mxu0 0
    %375 = vmatpush1.bf16.xpose.msra.mxu0 0
    %376 = vmatprep.mubr.bf16.mxu0 0
    %377 = vmatmul.mubr.bf16.gmra.mrb[0].mxu0 %v339
    %v378 = vpop.f32.mrb[0].mxu0
    %v379 = vadd.f32 0.0, %v378
    %v380 = vpop.f32.mrb[0].mxu0
    %v381 = vpop.f32.mrb[0].mxu0
    %v382 = vpop.f32.mrb[0].mxu0
    %383 = vdwg.mxu0
    %v384 = vmul.f32 %v379, 0.17677669
    %v385 = vadd.f32 %v384, %v218
    %v386 = vsel %vm270, %v385, -inf
    %387 = vmax.xlane.f32.xlu0 %v386
    %v388 = vpop.xlane.xlu0 %387
    %v389 = vsub.f32 %v385, %v388
    %v390 = vmul.f32 %v389, 1.442695
    %v391 = vpow.pop %v390
    %v392 = vsel %vm270, %v391, 0.0
    %393 = vadd.xlane.f32.xlu0 %v392
    %v394 = vpop.xlane.xlu0 %393
    %v395 = vrcp.pop %v394
    %v396 = vmul.f32 %v391, %v395
    %v397 = vpack.c.bf16 %v396, %v396
    %398 = vrot.lane.b32.xlu0 %v220, 32
    %v399 = vpop.permute.xlu0 %398
    %v401 = vsel %vm270, %v397, 0
    %v404 = vsel %vm289, %v399, 0
    %406 = vmatprep.subr.bf16.mxu0 0
    %407 = vmatpush1.bf16.msra.mxu0 %v404
    %408 = vmatprep.subr.bf16.mxu0 0
    %409 = vmatpush1.bf16.msra.mxu0 0
    %410 = vmatprep.subr.bf16.mxu0 0
    %411 = vmatpush1.bf16.msra.mxu0 0
    %412 = vmatprep.subr.bf16.mxu0 0
    %413 = vmatpush1.bf16.msra.mxu0 0
    %414 = vmatprep.subr.bf16.mxu0 0
    %415 = vmatpush1.bf16.msra.mxu0 0
    %416 = vmatprep.subr.bf16.mxu0 0
    %417 = vmatpush1.bf16.msra.mxu0 0
    %418 = vmatprep.subr.bf16.mxu0 0
    %419 = vmatpush1.bf16.msra.mxu0 0
    %420 = vmatprep.subr.bf16.mxu0 0
    %421 = vmatpush1.bf16.msra.mxu0 0
    %422 = vmatprep.subr.bf16.mxu0 0
    %423 = vmatpush1.bf16.msra.mxu0 0
    %424 = vmatprep.subr.bf16.mxu0 0
    %425 = vmatpush1.bf16.msra.mxu0 0
    %426 = vmatprep.subr.bf16.mxu0 0
    %427 = vmatpush1.bf16.msra.mxu0 0
    %428 = vmatprep.subr.bf16.mxu0 0
    %429 = vmatpush1.bf16.msra.mxu0 0
    %430 = vmatprep.subr.bf16.mxu0 0
    %431 = vmatpush1.bf16.msra.mxu0 0
    %432 = vmatprep.subr.bf16.mxu0 0
    %433 = vmatpush1.bf16.msra.mxu0 0
    %434 = vmatprep.subr.bf16.mxu0 0
    %435 = vmatpush1.bf16.msra.mxu0 0
    %436 = vmatprep.subr.bf16.mxu0 0
    %437 = vmatpush1.bf16.msra.mxu0 0
    %438 = vmatprep.mubr.bf16.mxu0 0
    %439 = vmatmul.mubr.bf16.gmra.mrb[0].mxu0 %v401
    %v440 = vpop.f32.mrb[0].mxu0
    %v441 = vadd.f32 0.0, %v440
    %v442 = vpop.f32.mrb[0].mxu0
    %v443 = vpop.f32.mrb[0].mxu0
    %v444 = vpop.f32.mrb[0].mxu0
    %445 = vdwg.mxu0
    %447 = vrot.lane.b32.xlu0 %v441, 32
    %v448 = vpop.permute.xlu0 %447
    %v450 = vsel %vm221, %v328, %v448
    %v451 = vpack.c.bf16 %v450, %v450
    %v452 = vld [vmem:[#allocation7] sm:$0xff]
    %v453 = vld [vmem:[#allocation7 + $0x8] sm:$0xff]
    %v454 = vld [vmem:[#allocation7 + $0x10] sm:$0xff]
    %v455 = vld [vmem:[#allocation7 + $0x18] sm:$0xff]
    %v456 = vld [vmem:[#allocation7 + $0x20] sm:$0xff]
    %v457 = vld [vmem:[#allocation7 + $0x28] sm:$0xff]
    %v458 = vld [vmem:[#allocation7 + $0x30] sm:$0xff]
    %v459 = vld [vmem:[#allocation7 + $0x38] sm:$0xff]
    %v460 = vld [vmem:[%s4] sm:$0x3]
    %v462 = vlaneseq
    %v463 = vshrl.u32 %v462, 7
    %v464 = vsub.s32 0, %v463
    %v465 = vrot.slane %v460, %v464
    %v466 = vlaneseq
    %v467 = vshrl.u32 %v466, 7
    %v468 = vsub.s32 1, %v467
    %v469 = vrot.slane %v460, %v468
    %v480 = vunpack.c.l.b16 %v452
    %v481 = vunpack.c.h.b16 %v452
    %v482 = vunpack.c.l.b16 %v453
    %v483 = vunpack.c.h.b16 %v453
    %v484 = vunpack.c.l.b16 %v454
    %v485 = vunpack.c.h.b16 %v454
    %v486 = vunpack.c.l.b16 %v455
    %v487 = vunpack.c.h.b16 %v455
    %v488 = vunpack.c.l.b16 %v456
    %v489 = vunpack.c.h.b16 %v456
    %v490 = vunpack.c.l.b16 %v457
    %v491 = vunpack.c.h.b16 %v457
    %v492 = vunpack.c.l.b16 %v458
    %v493 = vunpack.c.h.b16 %v458
    %v494 = vunpack.c.l.b16 %v459
    %v495 = vunpack.c.h.b16 %v459
    %v496 = vpack.c.b16 %v482, %v480
    %v497 = vpack.c.b16 %v483, %v481
    %v498 = vpack.c.b16 %v486, %v484
    %v499 = vpack.c.b16 %v487, %v485
    %v500 = vpack.c.b16 %v490, %v488
    %v501 = vpack.c.b16 %v491, %v489
    %v502 = vpack.c.b16 %v494, %v492
    %v503 = vpack.c.b16 %v495, %v493
    %v513 = vsel %vm146, %v451, 0
    %515 = vmatprep.subr.bf16.mxu0 %v497
    %516 = vmatpush1.bf16.msra.mxu0 %v496
    %517 = vmatprep.subr.bf16.mxu0 %v499
    %518 = vmatpush1.bf16.msra.mxu0 %v498
    %519 = vmatprep.subr.bf16.mxu0 %v501
    %520 = vmatpush1.bf16.msra.mxu0 %v500
    %521 = vmatprep.subr.bf16.mxu0 %v503
    %522 = vmatpush1.bf16.msra.mxu0 %v502
    %523 = vmatprep.subr.bf16.mxu0 0
    %524 = vmatpush1.bf16.msra.mxu0 0
    %525 = vmatprep.subr.bf16.mxu0 0
    %526 = vmatpush1.bf16.msra.mxu0 0
    %527 = vmatprep.subr.bf16.mxu0 0
    %528 = vmatpush1.bf16.msra.mxu0 0
    %529 = vmatprep.subr.bf16.mxu0 0
    %530 = vmatpush1.bf16.msra.mxu0 0
    %531 = vmatprep.subr.bf16.mxu0 0
    %532 = vmatpush1.bf16.msra.mxu0 0
    %533 = vmatprep.subr.bf16.mxu0 0
    %534 = vmatpush1.bf16.msra.mxu0 0
    %535 = vmatprep.subr.bf16.mxu0 0
    %536 = vmatpush1.bf16.msra.mxu0 0
    %537 = vmatprep.subr.bf16.mxu0 0
    %538 = vmatpush1.bf16.msra.mxu0 0
    %539 = vmatprep.subr.bf16.mxu0 0
    %540 = vmatpush1.bf16.msra.mxu0 0
    %541 = vmatprep.subr.bf16.mxu0 0
    %542 = vmatpush1.bf16.msra.mxu0 0
    %543 = vmatprep.subr.bf16.mxu0 0
    %544 = vmatpush1.bf16.msra.mxu0 0
    %545 = vmatprep.subr.bf16.mxu0 0
    %546 = vmatpush1.bf16.msra.mxu0 0
    %547 = vmatprep.mubr.bf16.mxu0 0
    %548 = vmatmul.mubr.bf16.gmra.mrb[0].mxu0 %v513
    %v549 = vpop.f32.mrb[0].mxu0
    %v550 = vadd.f32 %v465, %v549
    %v551 = vpop.f32.mrb[0].mxu0
    %v552 = vadd.f32 %v469, %v551
    %v553 = vpop.f32.mrb[0].mxu0
    %v554 = vpop.f32.mrb[0].mxu0
    %555 = vdwg.mxu0
    %v556 = vmax.f32 %v550, 0.0
    %v557 = vmax.f32 %v552, 0.0
    %v558 = vpack.c.bf16 %v556, %v556
    %v559 = vpack.c.bf16 %v557, %v557
    %v560 = vld [vmem:[#allocation8] sm:$0xf]
    %v561 = vld [vmem:[#allocation8 + $0x4] sm:$0xf]
    %v562 = vld [vmem:[#allocation8 + $0x8] sm:$0xf]
    %v563 = vld [vmem:[#allocation8 + $0xc] sm:$0xf]
    %v564 = vld [vmem:[#allocation8 + $0x10] sm:$0xf]
    %v565 = vld [vmem:[#allocation8 + $0x14] sm:$0xf]
    %v566 = vld [vmem:[#allocation8 + $0x18] sm:$0xf]
    %v567 = vld [vmem:[#allocation8 + $0x1c] sm:$0xf]
    %v568 = vld [vmem:[#allocation8 + $0x20] sm:$0xf]
    %v569 = vld [vmem:[#allocation8 + $0x24] sm:$0xf]
    %v570 = vld [vmem:[#allocation8 + $0x28] sm:$0xf]
    %v571 = vld [vmem:[#allocation8 + $0x2c] sm:$0xf]
    %v572 = vld [vmem:[#allocation8 + $0x30] sm:$0xf]
    %v573 = vld [vmem:[#allocation8 + $0x34] sm:$0xf]
    %v574 = vld [vmem:[#allocation8 + $0x38] sm:$0xf]
    %v575 = vld [vmem:[#allocation8 + $0x3c] sm:$0xf]
    %v576 = vld [vmem:[#allocation8 + $0x40] sm:$0xf]
    %v577 = vld [vmem:[#allocation8 + $0x44] sm:$0xf]
    %v578 = vld [vmem:[#allocation8 + $0x48] sm:$0xf]
    %v579 = vld [vmem:[#allocation8 + $0x4c] sm:$0xf]
    %v580 = vld [vmem:[#allocation8 + $0x50] sm:$0xf]
    %v581 = vld [vmem:[#allocation8 + $0x54] sm:$0xf]
    %v582 = vld [vmem:[#allocation8 + $0x58] sm:$0xf]
    %v583 = vld [vmem:[#allocation8 + $0x5c] sm:$0xf]
    %v584 = vld [vmem:[#allocation8 + $0x60] sm:$0xf]
    %v585 = vld [vmem:[#allocation8 + $0x64] sm:$0xf]
    %v586 = vld [vmem:[#allocation8 + $0x68] sm:$0xf]
    %v587 = vld [vmem:[#allocation8 + $0x6c] sm:$0xf]
    %v588 = vld [vmem:[#allocation8 + $0x70] sm:$0xf]
    %v589 = vld [vmem:[#allocation8 + $0x74] sm:$0xf]
    %v590 = vld [vmem:[#allocation8 + $0x78] sm:$0xf]
    %v591 = vld [vmem:[#allocation8 + $0x7c] sm:$0xf]
    %v592 = vld [vmem:[%s6] sm:$0x1]
    %v594 = vlaneseq
    %v595 = vshrl.u32 %v594, 7
    %v596 = vsub.s32 0, %v595
    %v597 = vrot.slane %v592, %v596
    %v631 = vunpack.c.l.b16 %v560
    %v632 = vunpack.c.l.b16 %v561
    %v633 = vunpack.c.l.b16 %v562
    %v634 = vunpack.c.l.b16 %v563
    %v635 = vunpack.c.l.b16 %v564
    %v636 = vunpack.c.l.b16 %v565
    %v637 = vunpack.c.l.b16 %v566
    %v638 = vunpack.c.l.b16 %v567
    %v639 = vunpack.c.l.b16 %v568
    %v640 = vunpack.c.l.b16 %v569
    %v641 = vunpack.c.l.b16 %v570
    %v642 = vunpack.c.l.b16 %v571
    %v643 = vunpack.c.l.b16 %v572
    %v644 = vunpack.c.l.b16 %v573
    %v645 = vunpack.c.l.b16 %v574
    %v646 = vunpack.c.l.b16 %v575
    %v647 = vunpack.c.l.b16 %v576
    %v648 = vunpack.c.l.b16 %v577
    %v649 = vunpack.c.l.b16 %v578
    %v650 = vunpack.c.l.b16 %v579
    %v651 = vunpack.c.l.b16 %v580
    %v652 = vunpack.c.l.b16 %v581
    %v653 = vunpack.c.l.b16 %v582
    %v654 = vunpack.c.l.b16 %v583
    %v655 = vunpack.c.l.b16 %v584
    %v656 = vunpack.c.l.b16 %v585
    %v657 = vunpack.c.l.b16 %v586
    %v658 = vunpack.c.l.b16 %v587
    %v659 = vunpack.c.l.b16 %v588
    %v660 = vunpack.c.l.b16 %v589
    %v661 = vunpack.c.l.b16 %v590
    %v662 = vunpack.c.l.b16 %v591
    %v663 = vpack.c.b16 %v632, %v631
    %v664 = vpack.c.b16 %v634, %v633
    %v665 = vpack.c.b16 %v636, %v635
    %v666 = vpack.c.b16 %v638, %v637
    %v667 = vpack.c.b16 %v640, %v639
    %v668 = vpack.c.b16 %v642, %v641
    %v669 = vpack.c.b16 %v644, %v643
    %v670 = vpack.c.b16 %v646, %v645
    %v671 = vpack.c.b16 %v648, %v647
    %v672 = vpack.c.b16 %v650, %v649
    %v673 = vpack.c.b16 %v652, %v651
    %v674 = vpack.c.b16 %v654, %v653
    %v675 = vpack.c.b16 %v656, %v655
    %v676 = vpack.c.b16 %v658, %v657
    %v677 = vpack.c.b16 %v660, %v659
    %v678 = vpack.c.b16 %v662, %v661
    %695 = vmatprep.subr.bf16.mxu0 0
    %696 = vmatpush1.bf16.msra.mxu0 %v663
    %697 = vmatprep.subr.bf16.mxu0 0
    %698 = vmatpush1.bf16.msra.mxu0 %v664
    %699 = vmatprep.subr.bf16.mxu0 0
    %700 = vmatpush1.bf16.msra.mxu0 %v665
    %701 = vmatprep.subr.bf16.mxu0 0
    %702 = vmatpush1.bf16.msra.mxu0 %v666
    %703 = vmatprep.subr.bf16.mxu0 0
    %704 = vmatpush1.bf16.msra.mxu0 %v667
    %705 = vmatprep.subr.bf16.mxu0 0
    %706 = vmatpush1.bf16.msra.mxu0 %v668
    %707 = vmatprep.subr.bf16.mxu0 0
    %708 = vmatpush1.bf16.msra.mxu0 %v669
    %709 = vmatprep.subr.bf16.mxu0 0
    %710 = vmatpush1.bf16.msra.mxu0 %v670
    %711 = vmatprep.subr.bf16.mxu0 0
    %712 = vmatpush1.bf16.msra.mxu0 %v671
    %713 = vmatprep.subr.bf16.mxu0 0
    %714 = vmatpush1.bf16.msra.mxu0 %v672
    %715 = vmatprep.subr.bf16.mxu0 0
    %716 = vmatpush1.bf16.msra.mxu0 %v673
    %717 = vmatprep.subr.bf16.mxu0 0
    %718 = vmatpush1.bf16.msra.mxu0 %v674
    %719 = vmatprep.subr.bf16.mxu0 0
    %720 = vmatpush1.bf16.msra.mxu0 %v675
    %721 = vmatprep.subr.bf16.mxu0 0
    %722 = vmatpush1.bf16.msra.mxu0 %v676
    %723 = vmatprep.subr.bf16.mxu0 0
    %724 = vmatpush1.bf16.msra.mxu0 %v677
    %725 = vmatprep.subr.bf16.mxu0 0
    %726 = vmatpush1.bf16.msra.mxu0 %v678
    %727 = vmatprep.mubr.bf16.mxu0 %v559
    %728 = vmatmul.mubr.bf16.gmra.mrb[0].mxu0 %v558
    %v729 = vpop.f32.mrb[0].mxu0
    %v730 = vadd.f32 %v597, %v729
    %v731 = vpop.f32.mrb[0].mxu0
    %v732 = vpop.f32.mrb[0].mxu0
    %v733 = vpop.f32.mrb[0].mxu0
    %734 = vdwg.mxu0
    %735 = vst [vmem:[#allocation10] sm:$0xff] %v730
    // Predicated region
    $region46: #{prefill.1} parent=1 // pred_check
      _
    $region47: #{prefill.1} parent=1 // pred_check_branch
      %737 = sbr.rel (0) target = $region49
    $region48: #{prefill.1} parent=1 // pred_region
      %s739 = ssub.s32 128, 128
      %740 = vsyncadd [#allocation4], %s739
      %s742 = sshll.u32 [#allocation10], 4
      %s743 = int_to_ptr.vmem [resolvable:$true] %s742
      %745 = dma.vmem_to_hbm [thread:$0]  %s743, 128, %s7, [#allocation4]
    $region49: #{prefill.1} parent=1 // pred_fallthru
      _
    // Predicated region
    $region50: #{prefill.1} parent=1 // pred_check
      _
    $region51: #{prefill.1} parent=1 // pred_check_branch
      %747 = sbr.rel (0) target = $region53
    $region52: #{prefill.1} parent=1 // pred_region
      %s749 = ssub.s32 1024, 1024
      %750 = vsyncadd [#allocation12], %s749
      %s751 = sshll.u32 [#allocation11], 4
      %s752 = int_to_ptr.vmem [resolvable:$true] %s751
      %757 = dma.vmem_to_hbm [thread:$0]  %s752, 1024, %s8, [#allocation12], 128, 128, 8
    $region53: #{prefill.1} parent=1 // pred_fallthru
      _
    // Predicated region
    $region54: #{prefill.1} parent=1 // pred_check
      _
    $region55: #{prefill.1} parent=1 // pred_check_branch
      %759 = sbr.rel (0) target = $region57
    $region56: #{prefill.1} parent=1 // pred_region
      %s761 = ssub.s32 1024, 1024
      %762 = vsyncadd [#allocation12], %s761
      %s763 = sshll.u32 [#allocation13], 4
      %s764 = int_to_ptr.vmem [resolvable:$true] %s763
      %769 = dma.vmem_to_hbm [thread:$0]  %s764, 1024, %s9, [#allocation12], 128, 128, 8
    $region57: #{prefill.1} parent=1 // pred_fallthru
      _
    // Predicated region
    $region58: #{prefill.1} parent=1 // pred_check
      _
    $region59: #{prefill.1} parent=1 // pred_check_branch
      %771 = sbr.rel (0) target = $region61
    $region60: #{prefill.1} parent=1 // pred_region
      %772 = dma.done [#allocation4], 128
    $region61: #{prefill.1} parent=1 // pred_fallthru
      _
    // Predicated region
    $region62: #{prefill.1} parent=1 // pred_check
      _
    $region63: #{prefill.1} parent=1 // pred_check_branch
      %774 = sbr.rel (0) target = $region65
    $region64: #{prefill.1} parent=1 // pred_region
      %775 = dma.done [#allocation12], 1024
    $region65: #{prefill.1} parent=1 // pred_fallthru
      _
    // Predicated region
    $region66: #{prefill.1} parent=1 // pred_check
      _
    $region67: #{prefill.1} parent=1 // pred_check_branch
      %777 = sbr.rel (0) target = $region69
    $region68: #{prefill.1} parent=1 // pred_region
      %778 = dma.done [#allocation12], 1024
    $region69: #{prefill.1} parent=1 // pred_fallthru
      _
    %779 = vsyncpa [#allocation3], 1
    %780 = vsyncpa [#allocation6], 1
    %781 = vsyncpa [#allocation9], 1
    %782 = vsyncpa [#allocation4], 1
    %783 = vsyncpa [#allocation12], 1

</llo_original>
